<compile_context>
chip_gen: v5e
topology: v5e:2x2
jax: 0.10.0
libtpu: 0.0.40
codegen_flags: <defaults>
</compile_context>

<pallas_src>
import functools

import jax
import jax.numpy as jnp
from jax.experimental import pallas as pl
from jax.experimental.pallas import tpu as pltpu

NEG_SLOPE = 0.2            # every LeakyReLU in the reference uses 0.2
BN_EPS = 1e-5
FEAT = 8                   # gcn2 output width (Linear(64, 8))


def _leaky(x):
    return jnp.where(x > 0, x, NEG_SLOPE * x)


def gnn_predictor_kernel(b, roi,
                         esum_ref, node_ref,
                         w1_ref, w2_ref, w3_ref, w4_ref, w5_ref,
                         wf1_ref, wf2_ref, wf3_ref,
                         rowvec_ref, bn3vec_ref, misc_ref,
                         spread_ref, keep_ref, gather_ref,
                         gsum_ref, gsumT_ref,
                         out_ref):
    br = b * roi

    # ---- unpack packed bias / BN-affine rows (one DMA each, sliced here) ----
    rv = rowvec_ref[...]                       # (8, roi) f32
    b1, b2 = rv[0:1, :], rv[1:2, :]
    g1, be1 = rv[2:3, :], rv[3:4, :]
    b3 = rv[4:5, :]
    g2, be2 = rv[5:6, :], rv[6:7, :]

    misc = misc_ref[...]                       # (8, 256) f32
    bf1 = misc[0:1, :]                         # (1, 256)
    b4 = misc[1:2, 0:64]                       # (1, 64)
    b5 = misc[2:3, 0:FEAT]                     # (1, 8)
    bf2 = misc[3:4, 0:32]                      # (1, 32)
    bf3 = misc[4:5, 0:2]                       # (1, 2)

    bn3v = bn3vec_ref[...]                     # (2, roi*8) f32, lane-dense
    g3, be3 = bn3v[0:1, :], bn3v[1:2, :]

    def mm(x, w_ref, bias):
        # bf16 MXU matmul, f32 accumulation, f32 bias add.
        return jnp.dot(x.astype(jnp.bfloat16), w_ref[...],
                       preferred_element_type=jnp.float32) + bias

    # ---- bn1/bn2: per-column training-mode stats via ones-row MXU matmul ----
    ones_br = jnp.ones((1, br), jnp.float32)
    inv_br = 1.0 / float(br)

    def bn_cols(x, gamma, beta):
        mean = jnp.dot(ones_br, x, preferred_element_type=jnp.float32) * inv_br
        c = x - mean
        var = jnp.dot(ones_br, c * c, preferred_element_type=jnp.float32) * inv_br
        return c * jax.lax.rsqrt(var + BN_EPS) * gamma + beta

    esum = esum_ref[...]                       # (br, 1) row-sums of edge

    # x = einsum('ijk,ijp->ijp', edge, node) == rowsum(edge) * node ; gcn
    x = esum * node_ref[...]
    x = _leaky(mm(x, w1_ref, b1))
    x = mm(x, w2_ref, b2)                      # (br, roi)
    x = bn_cols(x, g1, be1)                    # bn1

    x = esum * x                               # einsum ; gcn1
    x = _leaky(mm(x, w3_ref, b3))
    x = bn_cols(x, g2, be2)                    # bn2

    x = esum * x                               # einsum ; gcn2
    x = _leaky(mm(x, w4_ref, b4))              # (br, 64)
    x = _leaky(mm(x, w5_ref, b5))              # (br, 8)

    # ---- flatten (br, 8) -> (b, roi*8) lane-dense, in-register --------------
    # xf[i, 8*j + p] = x[i*roi + j, p]; selection matrices are host-built.
    # All three steps stay f32 so the rearrangement is exact.
    x_t = jnp.dot(x, spread_ref[...], preferred_element_type=jnp.float32)   # (br, f)
    x_m = x_t * keep_ref[...]                                               # (br, f)
    xf = jnp.dot(gather_ref[...], x_m, preferred_element_type=jnp.float32)  # (b, f)

    # ---- bn3: BatchNorm1d(roi) on (b, roi, 8): channel j == lane group q//8 -
    # Two skinny group matmuls (reduce f->roi, broadcast roi->f); two-pass
    # (centered) variance to avoid E[x^2]-E[x]^2 cancellation.
    ones_b = jnp.ones((1, b), jnp.float32)
    inv_cnt = 1.0 / float(b * FEAT)
    gsum = gsum_ref[...]                       # (f, roi)
    gsumT = gsumT_ref[...]                     # (roi, f)

    colsum = jnp.dot(ones_b, xf, preferred_element_type=jnp.float32)        # (1, f)
    mean_ch = jnp.dot(colsum, gsum, preferred_element_type=jnp.float32) * inv_cnt
    mean_lane = jnp.dot(mean_ch, gsumT, preferred_element_type=jnp.float32) # (1, f)
    c3 = xf - mean_lane
    colsq = jnp.dot(ones_b, c3 * c3, preferred_element_type=jnp.float32)    # (1, f)
    var_ch = jnp.dot(colsq, gsum, preferred_element_type=jnp.float32) * inv_cnt
    inv_ch = jax.lax.rsqrt(var_ch + BN_EPS)                                 # (1, roi)
    inv_lane = jnp.dot(inv_ch, gsumT, preferred_element_type=jnp.float32)   # (1, f)
    xf = c3 * inv_lane * g3 + be3                                           # (b, f)

    # ---- fcn ----------------------------------------------------------------
    h = _leaky(mm(xf, wf1_ref, bf1))           # (b, 256)
    h = _leaky(mm(h, wf2_ref, bf2))            # (b, 32)
    out_ref[...] = mm(h, wf3_ref, bf3)         # (b, 2)


def init_params(key, node_input_dim, roi):
    """Parameters with all per-call prep already done (bf16 weights, packed
    bias rows, lane-dense bn3 gamma/beta)."""
    ks = jax.random.split(key, 8)

    def lin(k, fin, fout):
        kw, kb = jax.random.split(k)
        bound = float(fin) ** -0.5
        w = jax.random.uniform(kw, (fin, fout), jnp.float32, -bound, bound)
        b = jax.random.uniform(kb, (1, fout), jnp.float32, -bound, bound)
        return w, b

    w1, b1 = lin(ks[0], node_input_dim, roi)   # gcn.0
    w2, b2 = lin(ks[1], roi, roi)              # gcn.2
    w3, b3 = lin(ks[2], roi, roi)              # gcn1.0
    w4, b4 = lin(ks[3], roi, 64)               # gcn2.0
    w5, b5 = lin(ks[4], 64, FEAT)              # gcn2.2
    wf1, bf1 = lin(ks[5], FEAT * roi, 256)     # fcn.0
    wf2, bf2 = lin(ks[6], 256, 32)             # fcn.2
    wf3, bf3 = lin(ks[7], 32, 2)               # fcn.4

    # BatchNorm affine params at PyTorch init (gamma=1, beta=0).
    ones_r = jnp.ones((1, roi), jnp.float32)
    zeros_r = jnp.zeros((1, roi), jnp.float32)
    g1, be1, g2, be2, g3, be3 = ones_r, zeros_r, ones_r, zeros_r, ones_r, zeros_r

    bf16 = lambda w: w.astype(jnp.bfloat16)

    # Pack the seven (1, roi) vectors into one sublane-sliced (8, roi) array.
    rowvecs = jnp.concatenate([b1, b2, g1, be1, b3, g2, be2, zeros_r], axis=0)

    # bn3 gamma/beta pre-broadcast to the lane-dense (roi*8) layout.
    bn3vecs = jnp.concatenate([jnp.repeat(g3, FEAT, axis=1),
                               jnp.repeat(be3, FEAT, axis=1)], axis=0)      # (2, f)

    # Remaining small biases packed one-per-row, padded to 256 lanes.
    def padrow(v, width=256):
        return jnp.pad(v, ((0, 0), (0, width - v.shape[1])))
    bias_misc = jnp.concatenate(
        [padrow(bf1), padrow(b4), padrow(b5), padrow(bf2), padrow(bf3),
         jnp.zeros((3, 256), jnp.float32)], axis=0)                          # (8, 256)

    return {'w1': bf16(w1), 'w2': bf16(w2), 'w3': bf16(w3), 'w4': bf16(w4),
            'w5': bf16(w5), 'wf1': bf16(wf1), 'wf2': bf16(wf2), 'wf3': bf16(wf3),
            'rowvecs': rowvecs, 'bn3vecs': bn3vecs, 'bias_misc': bias_misc}


def make_constants(b, roi):
    """Host-built selection / group matrices (computed once, reused forever)."""
    f = roi * FEAT
    br = b * roi
    lane = jnp.arange(f)
    rows = jnp.arange(br)
    # spread[p, q] = [q % 8 == p]            (8, f)
    spread = (lane[None, :] % FEAT == jnp.arange(FEAT)[:, None]).astype(jnp.float32)
    # keep[r, q]  = [q // 8 == r % roi]      (br, f)
    keep = ((lane[None, :] // FEAT) == (rows[:, None] % roi)).astype(jnp.float32)
    # gather[i, r] = [r // roi == i]         (b, br)
    gather = ((rows[None, :] // roi) == jnp.arange(b)[:, None]).astype(jnp.float32)
    # gsum[q, j] = [q // 8 == j]             (f, roi);  gsumT = gsum.T
    gsum = ((lane[:, None] // FEAT) == jnp.arange(roi)[None, :]).astype(jnp.float32)
    gsumT = jnp.transpose(gsum)
    return {'spread': spread, 'keep': keep, 'gather': gather,
            'gsum': gsum, 'gsumT': gsumT}


def gnn_predictor_forward(node, edge, params, consts):
    b, roi, d = node.shape
    br = b * roi

    # Wrapper-side glue: only the row-sum of edge is ever needed by the
    # einsum, so the (b, roi, roi) edge tensor never enters VMEM.
    node2d = node.reshape(br, d)
    esum = jnp.sum(edge, axis=-1).reshape(br, 1)

    vmem = pl.BlockSpec(memory_space=pltpu.MemorySpace.VMEM)
    ins = [esum, node2d,
           params['w1'], params['w2'], params['w3'], params['w4'], params['w5'],
           params['wf1'], params['wf2'], params['wf3'],
           params['rowvecs'], params['bn3vecs'], params['bias_misc'],
           consts['spread'], consts['keep'], consts['gather'],
           consts['gsum'], consts['gsumT']]

    return pl.pallas_call(
        functools.partial(gnn_predictor_kernel, b, roi),
        out_shape=jax.ShapeDtypeStruct((b, 2), jnp.float32),
        in_specs=[vmem] * len(ins),
        out_specs=vmem,
        compiler_params=pltpu.CompilerParams(vmem_limit_bytes=32 * 1024 * 1024),
    )(*ins)


if __name__ == "__main__":
    B = 2
    ROI = 16            # roi_num (kept small; roi*8 = 128 stays lane-aligned)
    NODE_DIM = 16       # node_input_dim

    key = jax.random.PRNGKey(0)
    k_node, k_edge, k_param = jax.random.split(key, 3)
    node = jax.random.normal(k_node, (B, ROI, NODE_DIM), jnp.float32)
    edge = jax.random.normal(k_edge, (B, ROI, ROI), jnp.float32)

    params = init_params(k_param, NODE_DIM, ROI)
    consts = make_constants(B, ROI)

    fwd = jax.jit(gnn_predictor_forward)
    out = jax.block_until_ready(fwd(node, edge, params, consts))
    assert out.shape == (B, 2) and out.dtype == jnp.float32
    print("KERNEL_OK")
</pallas_src>

<mosaic_0001>
module attributes {stable_mosaic.version = 11 : i64} {
  func.func @gnn_predictor_kernel(%arg0: memref<32x1xf32, #tpu.memory_space<vmem>>, %arg1: memref<32x16xf32, #tpu.memory_space<vmem>>, %arg2: memref<16x16xbf16, #tpu.memory_space<vmem>>, %arg3: memref<16x16xbf16, #tpu.memory_space<vmem>>, %arg4: memref<16x16xbf16, #tpu.memory_space<vmem>>, %arg5: memref<16x64xbf16, #tpu.memory_space<vmem>>, %arg6: memref<64x8xbf16, #tpu.memory_space<vmem>>, %arg7: memref<128x256xbf16, #tpu.memory_space<vmem>>, %arg8: memref<256x32xbf16, #tpu.memory_space<vmem>>, %arg9: memref<32x2xbf16, #tpu.memory_space<vmem>>, %arg10: memref<8x16xf32, #tpu.memory_space<vmem>>, %arg11: memref<2x128xf32, #tpu.memory_space<vmem>>, %arg12: memref<8x256xf32, #tpu.memory_space<vmem>>, %arg13: memref<8x128xf32, #tpu.memory_space<vmem>>, %arg14: memref<32x128xf32, #tpu.memory_space<vmem>>, %arg15: memref<2x32xf32, #tpu.memory_space<vmem>>, %arg16: memref<128x16xf32, #tpu.memory_space<vmem>>, %arg17: memref<16x128xf32, #tpu.memory_space<vmem>>, %arg18: memref<2x2xf32, #tpu.memory_space<vmem>>) attributes {dimension_semantics = [], scalar_prefetch = 0 : i64, scratch_operands = 0 : i64, tpu.core_type = #tpu.core_type<tc>} {
    %c0 = arith.constant 0 : index
    %c0_0 = arith.constant 0 : index
    %0 = vector.load %arg10[%c0, %c0_0] : memref<8x16xf32, #tpu.memory_space<vmem>>, vector<8x16xf32>
    %1 = vector.extract_strided_slice %0 {offsets = [0, 0], sizes = [1, 16], strides = [1, 1]} : vector<8x16xf32> to vector<1x16xf32>
    %2 = vector.extract_strided_slice %0 {offsets = [1, 0], sizes = [1, 16], strides = [1, 1]} : vector<8x16xf32> to vector<1x16xf32>
    %3 = vector.extract_strided_slice %0 {offsets = [2, 0], sizes = [1, 16], strides = [1, 1]} : vector<8x16xf32> to vector<1x16xf32>
    %4 = vector.extract_strided_slice %0 {offsets = [3, 0], sizes = [1, 16], strides = [1, 1]} : vector<8x16xf32> to vector<1x16xf32>
    %5 = vector.extract_strided_slice %0 {offsets = [4, 0], sizes = [1, 16], strides = [1, 1]} : vector<8x16xf32> to vector<1x16xf32>
    %6 = vector.extract_strided_slice %0 {offsets = [5, 0], sizes = [1, 16], strides = [1, 1]} : vector<8x16xf32> to vector<1x16xf32>
    %7 = vector.extract_strided_slice %0 {offsets = [6, 0], sizes = [1, 16], strides = [1, 1]} : vector<8x16xf32> to vector<1x16xf32>
    %c0_1 = arith.constant 0 : index
    %c0_2 = arith.constant 0 : index
    %8 = vector.load %arg12[%c0_1, %c0_2] : memref<8x256xf32, #tpu.memory_space<vmem>>, vector<8x256xf32>
    %9 = vector.extract_strided_slice %8 {offsets = [0, 0], sizes = [1, 256], strides = [1, 1]} : vector<8x256xf32> to vector<1x256xf32>
    %10 = vector.extract_strided_slice %8 {offsets = [1, 0], sizes = [1, 64], strides = [1, 1]} : vector<8x256xf32> to vector<1x64xf32>
    %11 = vector.extract_strided_slice %8 {offsets = [2, 0], sizes = [1, 8], strides = [1, 1]} : vector<8x256xf32> to vector<1x8xf32>
    %12 = vector.extract_strided_slice %8 {offsets = [3, 0], sizes = [1, 32], strides = [1, 1]} : vector<8x256xf32> to vector<1x32xf32>
    %13 = vector.extract_strided_slice %8 {offsets = [4, 0], sizes = [1, 2], strides = [1, 1]} : vector<8x256xf32> to vector<1x2xf32>
    %c0_3 = arith.constant 0 : index
    %c0_4 = arith.constant 0 : index
    %14 = vector.load %arg11[%c0_3, %c0_4] : memref<2x128xf32, #tpu.memory_space<vmem>>, vector<2x128xf32>
    %15 = vector.extract_strided_slice %14 {offsets = [0, 0], sizes = [1, 128], strides = [1, 1]} : vector<2x128xf32> to vector<1x128xf32>
    %16 = vector.extract_strided_slice %14 {offsets = [1, 0], sizes = [1, 128], strides = [1, 1]} : vector<2x128xf32> to vector<1x128xf32>
    %cst = arith.constant 1.000000e+00 : f32
    %17 = vector.broadcast %cst : f32 to vector<1x32xf32>
    %c0_5 = arith.constant 0 : index
    %c0_6 = arith.constant 0 : index
    %18 = vector.load %arg0[%c0_5, %c0_6] : memref<32x1xf32, #tpu.memory_space<vmem>>, vector<32x1xf32>
    %c0_7 = arith.constant 0 : index
    %c0_8 = arith.constant 0 : index
    %19 = vector.load %arg1[%c0_7, %c0_8] : memref<32x16xf32, #tpu.memory_space<vmem>>, vector<32x16xf32>
    %20 = vector.broadcast %18 : vector<32x1xf32> to vector<32x16xf32>
    %21 = arith.mulf %20, %19 : vector<32x16xf32>
    %22 = arith.truncf %21 : vector<32x16xf32> to vector<32x16xbf16>
    %c0_9 = arith.constant 0 : index
    %c0_10 = arith.constant 0 : index
    %23 = vector.load %arg2[%c0_9, %c0_10] : memref<16x16xbf16, #tpu.memory_space<vmem>>, vector<16x16xbf16>
    %cst_11 = arith.constant dense<0.000000e+00> : vector<32x16xf32>
    %24 = tpu.matmul %22, %23, %cst_11 {dimension_numbers = #tpu.dot_dimension_numbers<[1], [0], [0], [1], [0, 0, 1, 1], [], []>} : vector<32x16xbf16>, vector<16x16xbf16>, vector<32x16xf32> -> vector<32x16xf32>
    %25 = vector.broadcast %1 : vector<1x16xf32> to vector<32x16xf32>
    %26 = arith.addf %24, %25 : vector<32x16xf32>
    %cst_12 = arith.constant 0.000000e+00 : f32
    %27 = vector.broadcast %cst_12 : f32 to vector<32x16xf32>
    %28 = arith.cmpf ogt, %26, %27 : vector<32x16xf32>
    %cst_13 = arith.constant 2.000000e-01 : f32
    %29 = vector.broadcast %cst_13 : f32 to vector<32x16xf32>
    %30 = arith.mulf %29, %26 : vector<32x16xf32>
    %31 = arith.select %28, %26, %30 : vector<32x16xi1>, vector<32x16xf32>
    %32 = arith.truncf %31 : vector<32x16xf32> to vector<32x16xbf16>
    %c0_14 = arith.constant 0 : index
    %c0_15 = arith.constant 0 : index
    %33 = vector.load %arg3[%c0_14, %c0_15] : memref<16x16xbf16, #tpu.memory_space<vmem>>, vector<16x16xbf16>
    %cst_16 = arith.constant dense<0.000000e+00> : vector<32x16xf32>
    %34 = tpu.matmul %32, %33, %cst_16 {dimension_numbers = #tpu.dot_dimension_numbers<[1], [0], [0], [1], [0, 0, 1, 1], [], []>} : vector<32x16xbf16>, vector<16x16xbf16>, vector<32x16xf32> -> vector<32x16xf32>
    %35 = vector.broadcast %2 : vector<1x16xf32> to vector<32x16xf32>
    %36 = arith.addf %34, %35 : vector<32x16xf32>
    %cst_17 = arith.constant dense<0.000000e+00> : vector<1x16xf32>
    %37 = tpu.matmul %17, %36, %cst_17 {dimension_numbers = #tpu.dot_dimension_numbers<[1], [0], [0], [1], [0, 0, 1, 1], [], []>} : vector<1x32xf32>, vector<32x16xf32>, vector<1x16xf32> -> vector<1x16xf32>
    %cst_18 = arith.constant 3.125000e-02 : f32
    %38 = vector.broadcast %cst_18 : f32 to vector<1x16xf32>
    %39 = arith.mulf %37, %38 : vector<1x16xf32>
    %40 = vector.broadcast %39 : vector<1x16xf32> to vector<32x16xf32>
    %41 = arith.subf %36, %40 : vector<32x16xf32>
    %42 = arith.mulf %41, %41 : vector<32x16xf32>
    %cst_19 = arith.constant dense<0.000000e+00> : vector<1x16xf32>
    %43 = tpu.matmul %17, %42, %cst_19 {dimension_numbers = #tpu.dot_dimension_numbers<[1], [0], [0], [1], [0, 0, 1, 1], [], []>} : vector<1x32xf32>, vector<32x16xf32>, vector<1x16xf32> -> vector<1x16xf32>
    %cst_20 = arith.constant 3.125000e-02 : f32
    %44 = vector.broadcast %cst_20 : f32 to vector<1x16xf32>
    %45 = arith.mulf %43, %44 : vector<1x16xf32>
    %cst_21 = arith.constant 9.99999974E-6 : f32
    %46 = vector.broadcast %cst_21 : f32 to vector<1x16xf32>
    %47 = arith.addf %45, %46 : vector<1x16xf32>
    %48 = math.rsqrt %47 : vector<1x16xf32>
    %49 = vector.broadcast %48 : vector<1x16xf32> to vector<32x16xf32>
    %50 = arith.mulf %41, %49 : vector<32x16xf32>
    %51 = vector.broadcast %3 : vector<1x16xf32> to vector<32x16xf32>
    %52 = arith.mulf %50, %51 : vector<32x16xf32>
    %53 = vector.broadcast %4 : vector<1x16xf32> to vector<32x16xf32>
    %54 = arith.addf %52, %53 : vector<32x16xf32>
    %55 = vector.broadcast %18 : vector<32x1xf32> to vector<32x16xf32>
    %56 = arith.mulf %55, %54 : vector<32x16xf32>
    %57 = arith.truncf %56 : vector<32x16xf32> to vector<32x16xbf16>
    %c0_22 = arith.constant 0 : index
    %c0_23 = arith.constant 0 : index
    %58 = vector.load %arg4[%c0_22, %c0_23] : memref<16x16xbf16, #tpu.memory_space<vmem>>, vector<16x16xbf16>
    %cst_24 = arith.constant dense<0.000000e+00> : vector<32x16xf32>
    %59 = tpu.matmul %57, %58, %cst_24 {dimension_numbers = #tpu.dot_dimension_numbers<[1], [0], [0], [1], [0, 0, 1, 1], [], []>} : vector<32x16xbf16>, vector<16x16xbf16>, vector<32x16xf32> -> vector<32x16xf32>
    %60 = vector.broadcast %5 : vector<1x16xf32> to vector<32x16xf32>
    %61 = arith.addf %59, %60 : vector<32x16xf32>
    %cst_25 = arith.constant 0.000000e+00 : f32
    %62 = vector.broadcast %cst_25 : f32 to vector<32x16xf32>
    %63 = arith.cmpf ogt, %61, %62 : vector<32x16xf32>
    %cst_26 = arith.constant 2.000000e-01 : f32
    %64 = vector.broadcast %cst_26 : f32 to vector<32x16xf32>
    %65 = arith.mulf %64, %61 : vector<32x16xf32>
    %66 = arith.select %63, %61, %65 : vector<32x16xi1>, vector<32x16xf32>
    %cst_27 = arith.constant dense<0.000000e+00> : vector<1x16xf32>
    %67 = tpu.matmul %17, %66, %cst_27 {dimension_numbers = #tpu.dot_dimension_numbers<[1], [0], [0], [1], [0, 0, 1, 1], [], []>} : vector<1x32xf32>, vector<32x16xf32>, vector<1x16xf32> -> vector<1x16xf32>
    %cst_28 = arith.constant 3.125000e-02 : f32
    %68 = vector.broadcast %cst_28 : f32 to vector<1x16xf32>
    %69 = arith.mulf %67, %68 : vector<1x16xf32>
    %70 = vector.broadcast %69 : vector<1x16xf32> to vector<32x16xf32>
    %71 = arith.subf %66, %70 : vector<32x16xf32>
    %72 = arith.mulf %71, %71 : vector<32x16xf32>
    %cst_29 = arith.constant dense<0.000000e+00> : vector<1x16xf32>
    %73 = tpu.matmul %17, %72, %cst_29 {dimension_numbers = #tpu.dot_dimension_numbers<[1], [0], [0], [1], [0, 0, 1, 1], [], []>} : vector<1x32xf32>, vector<32x16xf32>, vector<1x16xf32> -> vector<1x16xf32>
    %cst_30 = arith.constant 3.125000e-02 : f32
    %74 = vector.broadcast %cst_30 : f32 to vector<1x16xf32>
    %75 = arith.mulf %73, %74 : vector<1x16xf32>
    %cst_31 = arith.constant 9.99999974E-6 : f32
    %76 = vector.broadcast %cst_31 : f32 to vector<1x16xf32>
    %77 = arith.addf %75, %76 : vector<1x16xf32>
    %78 = math.rsqrt %77 : vector<1x16xf32>
    %79 = vector.broadcast %78 : vector<1x16xf32> to vector<32x16xf32>
    %80 = arith.mulf %71, %79 : vector<32x16xf32>
    %81 = vector.broadcast %6 : vector<1x16xf32> to vector<32x16xf32>
    %82 = arith.mulf %80, %81 : vector<32x16xf32>
    %83 = vector.broadcast %7 : vector<1x16xf32> to vector<32x16xf32>
    %84 = arith.addf %82, %83 : vector<32x16xf32>
    %85 = vector.broadcast %18 : vector<32x1xf32> to vector<32x16xf32>
    %86 = arith.mulf %85, %84 : vector<32x16xf32>
    %87 = arith.truncf %86 : vector<32x16xf32> to vector<32x16xbf16>
    %c0_32 = arith.constant 0 : index
    %c0_33 = arith.constant 0 : index
    %88 = vector.load %arg5[%c0_32, %c0_33] : memref<16x64xbf16, #tpu.memory_space<vmem>>, vector<16x64xbf16>
    %cst_34 = arith.constant dense<0.000000e+00> : vector<32x64xf32>
    %89 = tpu.matmul %87, %88, %cst_34 {dimension_numbers = #tpu.dot_dimension_numbers<[1], [0], [0], [1], [0, 0, 1, 1], [], []>} : vector<32x16xbf16>, vector<16x64xbf16>, vector<32x64xf32> -> vector<32x64xf32>
    %90 = vector.broadcast %10 : vector<1x64xf32> to vector<32x64xf32>
    %91 = arith.addf %89, %90 : vector<32x64xf32>
    %cst_35 = arith.constant 0.000000e+00 : f32
    %92 = vector.broadcast %cst_35 : f32 to vector<32x64xf32>
    %93 = arith.cmpf ogt, %91, %92 : vector<32x64xf32>
    %cst_36 = arith.constant 2.000000e-01 : f32
    %94 = vector.broadcast %cst_36 : f32 to vector<32x64xf32>
    %95 = arith.mulf %94, %91 : vector<32x64xf32>
    %96 = arith.select %93, %91, %95 : vector<32x64xi1>, vector<32x64xf32>
    %97 = arith.truncf %96 : vector<32x64xf32> to vector<32x64xbf16>
    %c0_37 = arith.constant 0 : index
    %c0_38 = arith.constant 0 : index
    %98 = vector.load %arg6[%c0_37, %c0_38] : memref<64x8xbf16, #tpu.memory_space<vmem>>, vector<64x8xbf16>
    %cst_39 = arith.constant dense<0.000000e+00> : vector<32x8xf32>
    %99 = tpu.matmul %97, %98, %cst_39 {dimension_numbers = #tpu.dot_dimension_numbers<[1], [0], [0], [1], [0, 0, 1, 1], [], []>} : vector<32x64xbf16>, vector<64x8xbf16>, vector<32x8xf32> -> vector<32x8xf32>
    %100 = vector.broadcast %11 : vector<1x8xf32> to vector<32x8xf32>
    %101 = arith.addf %99, %100 : vector<32x8xf32>
    %cst_40 = arith.constant 0.000000e+00 : f32
    %102 = vector.broadcast %cst_40 : f32 to vector<32x8xf32>
    %103 = arith.cmpf ogt, %101, %102 : vector<32x8xf32>
    %cst_41 = arith.constant 2.000000e-01 : f32
    %104 = vector.broadcast %cst_41 : f32 to vector<32x8xf32>
    %105 = arith.mulf %104, %101 : vector<32x8xf32>
    %106 = arith.select %103, %101, %105 : vector<32x8xi1>, vector<32x8xf32>
    %c0_42 = arith.constant 0 : index
    %c0_43 = arith.constant 0 : index
    %107 = vector.load %arg13[%c0_42, %c0_43] : memref<8x128xf32, #tpu.memory_space<vmem>>, vector<8x128xf32>
    %cst_44 = arith.constant dense<0.000000e+00> : vector<32x128xf32>
    %108 = tpu.matmul %106, %107, %cst_44 {dimension_numbers = #tpu.dot_dimension_numbers<[1], [0], [0], [1], [0, 0, 1, 1], [], []>} : vector<32x8xf32>, vector<8x128xf32>, vector<32x128xf32> -> vector<32x128xf32>
    %c0_45 = arith.constant 0 : index
    %c0_46 = arith.constant 0 : index
    %109 = vector.load %arg14[%c0_45, %c0_46] : memref<32x128xf32, #tpu.memory_space<vmem>>, vector<32x128xf32>
    %110 = arith.mulf %108, %109 : vector<32x128xf32>
    %c0_47 = arith.constant 0 : index
    %c0_48 = arith.constant 0 : index
    %111 = vector.load %arg15[%c0_47, %c0_48] : memref<2x32xf32, #tpu.memory_space<vmem>>, vector<2x32xf32>
    %cst_49 = arith.constant dense<0.000000e+00> : vector<2x128xf32>
    %112 = tpu.matmul %111, %110, %cst_49 {dimension_numbers = #tpu.dot_dimension_numbers<[1], [0], [0], [1], [0, 0, 1, 1], [], []>} : vector<2x32xf32>, vector<32x128xf32>, vector<2x128xf32> -> vector<2x128xf32>
    %cst_50 = arith.constant 1.000000e+00 : f32
    %113 = vector.broadcast %cst_50 : f32 to vector<1x2xf32>
    %c0_51 = arith.constant 0 : index
    %c0_52 = arith.constant 0 : index
    %114 = vector.load %arg16[%c0_51, %c0_52] : memref<128x16xf32, #tpu.memory_space<vmem>>, vector<128x16xf32>
    %c0_53 = arith.constant 0 : index
    %c0_54 = arith.constant 0 : index
    %115 = vector.load %arg17[%c0_53, %c0_54] : memref<16x128xf32, #tpu.memory_space<vmem>>, vector<16x128xf32>
    %cst_55 = arith.constant dense<0.000000e+00> : vector<1x128xf32>
    %116 = tpu.matmul %113, %112, %cst_55 {dimension_numbers = #tpu.dot_dimension_numbers<[1], [0], [0], [1], [0, 0, 1, 1], [], []>} : vector<1x2xf32>, vector<2x128xf32>, vector<1x128xf32> -> vector<1x128xf32>
    %cst_56 = arith.constant dense<0.000000e+00> : vector<1x16xf32>
    %117 = tpu.matmul %116, %114, %cst_56 {dimension_numbers = #tpu.dot_dimension_numbers<[1], [0], [0], [1], [0, 0, 1, 1], [], []>} : vector<1x128xf32>, vector<128x16xf32>, vector<1x16xf32> -> vector<1x16xf32>
    %cst_57 = arith.constant 6.250000e-02 : f32
    %118 = vector.broadcast %cst_57 : f32 to vector<1x16xf32>
    %119 = arith.mulf %117, %118 : vector<1x16xf32>
    %cst_58 = arith.constant dense<0.000000e+00> : vector<1x128xf32>
    %120 = tpu.matmul %119, %115, %cst_58 {dimension_numbers = #tpu.dot_dimension_numbers<[1], [0], [0], [1], [0, 0, 1, 1], [], []>} : vector<1x16xf32>, vector<16x128xf32>, vector<1x128xf32> -> vector<1x128xf32>
    %121 = vector.broadcast %120 : vector<1x128xf32> to vector<2x128xf32>
    %122 = arith.subf %112, %121 : vector<2x128xf32>
    %123 = arith.mulf %122, %122 : vector<2x128xf32>
    %cst_59 = arith.constant dense<0.000000e+00> : vector<1x128xf32>
    %124 = tpu.matmul %113, %123, %cst_59 {dimension_numbers = #tpu.dot_dimension_numbers<[1], [0], [0], [1], [0, 0, 1, 1], [], []>} : vector<1x2xf32>, vector<2x128xf32>, vector<1x128xf32> -> vector<1x128xf32>
    %cst_60 = arith.constant dense<0.000000e+00> : vector<1x16xf32>
    %125 = tpu.matmul %124, %114, %cst_60 {dimension_numbers = #tpu.dot_dimension_numbers<[1], [0], [0], [1], [0, 0, 1, 1], [], []>} : vector<1x128xf32>, vector<128x16xf32>, vector<1x16xf32> -> vector<1x16xf32>
    %cst_61 = arith.constant 6.250000e-02 : f32
    %126 = vector.broadcast %cst_61 : f32 to vector<1x16xf32>
    %127 = arith.mulf %125, %126 : vector<1x16xf32>
    %cst_62 = arith.constant 9.99999974E-6 : f32
    %128 = vector.broadcast %cst_62 : f32 to vector<1x16xf32>
    %129 = arith.addf %127, %128 : vector<1x16xf32>
    %130 = math.rsqrt %129 : vector<1x16xf32>
    %cst_63 = arith.constant dense<0.000000e+00> : vector<1x128xf32>
    %131 = tpu.matmul %130, %115, %cst_63 {dimension_numbers = #tpu.dot_dimension_numbers<[1], [0], [0], [1], [0, 0, 1, 1], [], []>} : vector<1x16xf32>, vector<16x128xf32>, vector<1x128xf32> -> vector<1x128xf32>
    %132 = vector.broadcast %131 : vector<1x128xf32> to vector<2x128xf32>
    %133 = arith.mulf %122, %132 : vector<2x128xf32>
    %134 = vector.broadcast %15 : vector<1x128xf32> to vector<2x128xf32>
    %135 = arith.mulf %133, %134 : vector<2x128xf32>
    %136 = vector.broadcast %16 : vector<1x128xf32> to vector<2x128xf32>
    %137 = arith.addf %135, %136 : vector<2x128xf32>
    %138 = arith.truncf %137 : vector<2x128xf32> to vector<2x128xbf16>
    %c0_64 = arith.constant 0 : index
    %c0_65 = arith.constant 0 : index
    %139 = vector.load %arg7[%c0_64, %c0_65] : memref<128x256xbf16, #tpu.memory_space<vmem>>, vector<128x256xbf16>
    %cst_66 = arith.constant dense<0.000000e+00> : vector<2x256xf32>
    %140 = tpu.matmul %138, %139, %cst_66 {dimension_numbers = #tpu.dot_dimension_numbers<[1], [0], [0], [1], [0, 0, 1, 1], [], []>} : vector<2x128xbf16>, vector<128x256xbf16>, vector<2x256xf32> -> vector<2x256xf32>
    %141 = vector.broadcast %9 : vector<1x256xf32> to vector<2x256xf32>
    %142 = arith.addf %140, %141 : vector<2x256xf32>
    %cst_67 = arith.constant 0.000000e+00 : f32
    %143 = vector.broadcast %cst_67 : f32 to vector<2x256xf32>
    %144 = arith.cmpf ogt, %142, %143 : vector<2x256xf32>
    %cst_68 = arith.constant 2.000000e-01 : f32
    %145 = vector.broadcast %cst_68 : f32 to vector<2x256xf32>
    %146 = arith.mulf %145, %142 : vector<2x256xf32>
    %147 = arith.select %144, %142, %146 : vector<2x256xi1>, vector<2x256xf32>
    %148 = arith.truncf %147 : vector<2x256xf32> to vector<2x256xbf16>
    %c0_69 = arith.constant 0 : index
    %c0_70 = arith.constant 0 : index
    %149 = vector.load %arg8[%c0_69, %c0_70] : memref<256x32xbf16, #tpu.memory_space<vmem>>, vector<256x32xbf16>
    %cst_71 = arith.constant dense<0.000000e+00> : vector<2x32xf32>
    %150 = tpu.matmul %148, %149, %cst_71 {dimension_numbers = #tpu.dot_dimension_numbers<[1], [0], [0], [1], [0, 0, 1, 1], [], []>} : vector<2x256xbf16>, vector<256x32xbf16>, vector<2x32xf32> -> vector<2x32xf32>
    %151 = vector.broadcast %12 : vector<1x32xf32> to vector<2x32xf32>
    %152 = arith.addf %150, %151 : vector<2x32xf32>
    %cst_72 = arith.constant 0.000000e+00 : f32
    %153 = vector.broadcast %cst_72 : f32 to vector<2x32xf32>
    %154 = arith.cmpf ogt, %152, %153 : vector<2x32xf32>
    %cst_73 = arith.constant 2.000000e-01 : f32
    %155 = vector.broadcast %cst_73 : f32 to vector<2x32xf32>
    %156 = arith.mulf %155, %152 : vector<2x32xf32>
    %157 = arith.select %154, %152, %156 : vector<2x32xi1>, vector<2x32xf32>
    %158 = arith.truncf %157 : vector<2x32xf32> to vector<2x32xbf16>
    %c0_74 = arith.constant 0 : index
    %c0_75 = arith.constant 0 : index
    %159 = vector.load %arg9[%c0_74, %c0_75] : memref<32x2xbf16, #tpu.memory_space<vmem>>, vector<32x2xbf16>
    %cst_76 = arith.constant dense<0.000000e+00> : vector<2x2xf32>
    %160 = tpu.matmul %158, %159, %cst_76 {dimension_numbers = #tpu.dot_dimension_numbers<[1], [0], [0], [1], [0, 0, 1, 1], [], []>} : vector<2x32xbf16>, vector<32x2xbf16>, vector<2x2xf32> -> vector<2x2xf32>
    %161 = vector.broadcast %13 : vector<1x2xf32> to vector<2x2xf32>
    %162 = arith.addf %160, %161 : vector<2x2xf32>
    %c0_77 = arith.constant 0 : index
    %c0_78 = arith.constant 0 : index
    %163 = vector.load %arg18[%c0_77, %c0_78] : memref<2x2xf32, #tpu.memory_space<vmem>>, vector<2x2xf32>
    tpu.vector_store %arg18[%c0_77, %c0_78], %162 {strides = array<i32>} : memref<2x2xf32, #tpu.memory_space<vmem>>, vector<2x2xf32>,
    return
  }
}

</mosaic_0001>

<llo_original>
// kernel: gnn_predictor_forward.1
$region0: #{gnn_predictor_forward.1}
  #allocation0 [shape = 'u32[]', space=smem, size = 0x4, offset = 0x4, fixed_abs, tag = 'smem constant byte address 0x4 - core index']
  #allocation1 [shape = 'u32[72,128]{1,0:T(1,128)}', space=vmem, size = 0x9000, scoped, tag = 'internal scratch']
  %s0 = inlined_call_operand.vmem [shape: f32[32,1], index: 0, kind: input, shape index: {}]
  %s1 = inlined_call_operand.vmem [shape: f32[32,16], index: 1, kind: input, shape index: {}]
  %s2 = inlined_call_operand.vmem [shape: bf16[16,16], index: 2, kind: input, shape index: {}]
  %s3 = inlined_call_operand.vmem [shape: bf16[16,16], index: 3, kind: input, shape index: {}]
  %s4 = inlined_call_operand.vmem [shape: bf16[16,16], index: 4, kind: input, shape index: {}]
  %s5 = inlined_call_operand.vmem [shape: bf16[16,64], index: 5, kind: input, shape index: {}]
  %s6 = inlined_call_operand.vmem [shape: bf16[64,8], index: 6, kind: input, shape index: {}]
  %s7 = inlined_call_operand.vmem [shape: bf16[128,256], index: 7, kind: input, shape index: {}]
  %s8 = inlined_call_operand.vmem [shape: bf16[256,32], index: 8, kind: input, shape index: {}]
  %s9 = inlined_call_operand.vmem [shape: bf16[32,2], index: 9, kind: input, shape index: {}]
  %s10 = inlined_call_operand.vmem [shape: f32[8,16], index: 10, kind: input, shape index: {}]
  %s11 = inlined_call_operand.vmem [shape: f32[2,128], index: 11, kind: input, shape index: {}]
  %s12 = inlined_call_operand.vmem [shape: f32[8,256], index: 12, kind: input, shape index: {}]
  %s13 = inlined_call_operand.vmem [shape: f32[8,128], index: 13, kind: input, shape index: {}]
  %s14 = inlined_call_operand.vmem [shape: f32[32,128], index: 14, kind: input, shape index: {}]
  %s15 = inlined_call_operand.vmem [shape: f32[2,32], index: 15, kind: input, shape index: {}]
  %s16 = inlined_call_operand.vmem [shape: f32[128,16], index: 16, kind: input, shape index: {}]
  %s17 = inlined_call_operand.vmem [shape: f32[16,128], index: 17, kind: input, shape index: {}]
  %s18 = inlined_call_operand.hbm [shape: f32[2,2], index: 18, kind: output, shape index: {}]
  %s19 = sld [smem:[#allocation0]]
  $region82: #{gnn_predictor_forward.1} parent=0
    _
  %s21 = ssub.s32 1, %s19
  %s22 = scalar_select 0, %s21, %s19
  $region1: #{gnn_predictor_forward.1} parent=0
    #allocation2 [shape = 'u8[1024]{0}', space=vmem, size = 0x400, scoped, tag = 'output window, operand 0, single buffered']
    #allocation3 [shape = 's32[1]{0}', space=sflag, size = 0x4, scoped, tag = 'scoped memory for gnn_predictor_forward.1']
    %23 = vsyncpa [#allocation3], 0
    // Predicated region
    $region2: #{gnn_predictor_forward.1} parent=1 // pred_check
      _
    $region3: #{gnn_predictor_forward.1} parent=1 // pred_check_branch
      %25 = sbr.rel (0) target = $region5
    $region4: #{gnn_predictor_forward.1} parent=1 // pred_region
      _
    $region5: #{gnn_predictor_forward.1} parent=1 // pred_fallthru
      _
    // Predicated region
    $region6: #{gnn_predictor_forward.1} parent=1 // pred_check
      _
    $region7: #{gnn_predictor_forward.1} parent=1 // pred_check_branch
      %27 = sbr.rel (0) target = $region9
    $region8: #{gnn_predictor_forward.1} parent=1 // pred_region
      _
    $region9: #{gnn_predictor_forward.1} parent=1 // pred_fallthru
      _
    // Predicated region
    $region10: #{gnn_predictor_forward.1} parent=1 // pred_check
      _
    $region11: #{gnn_predictor_forward.1} parent=1 // pred_check_branch
      %29 = sbr.rel (0) target = $region13
    $region12: #{gnn_predictor_forward.1} parent=1 // pred_region
      _
    $region13: #{gnn_predictor_forward.1} parent=1 // pred_fallthru
      _
    // Predicated region
    $region14: #{gnn_predictor_forward.1} parent=1 // pred_check
      _
    $region15: #{gnn_predictor_forward.1} parent=1 // pred_check_branch
      %31 = sbr.rel (0) target = $region17
    $region16: #{gnn_predictor_forward.1} parent=1 // pred_region
      _
    $region17: #{gnn_predictor_forward.1} parent=1 // pred_fallthru
      _
    // Predicated region
    $region18: #{gnn_predictor_forward.1} parent=1 // pred_check
      _
    $region19: #{gnn_predictor_forward.1} parent=1 // pred_check_branch
      %33 = sbr.rel (0) target = $region21
    $region20: #{gnn_predictor_forward.1} parent=1 // pred_region
      _
    $region21: #{gnn_predictor_forward.1} parent=1 // pred_fallthru
      _
    // Predicated region
    $region22: #{gnn_predictor_forward.1} parent=1 // pred_check
      _
    $region23: #{gnn_predictor_forward.1} parent=1 // pred_check_branch
      %35 = sbr.rel (0) target = $region25
    $region24: #{gnn_predictor_forward.1} parent=1 // pred_region
      _
    $region25: #{gnn_predictor_forward.1} parent=1 // pred_fallthru
      _
    // Predicated region
    $region26: #{gnn_predictor_forward.1} parent=1 // pred_check
      _
    $region27: #{gnn_predictor_forward.1} parent=1 // pred_check_branch
      %37 = sbr.rel (0) target = $region29
    $region28: #{gnn_predictor_forward.1} parent=1 // pred_region
      _
    $region29: #{gnn_predictor_forward.1} parent=1 // pred_fallthru
      _
    // Predicated region
    $region30: #{gnn_predictor_forward.1} parent=1 // pred_check
      _
    $region31: #{gnn_predictor_forward.1} parent=1 // pred_check_branch
      %39 = sbr.rel (0) target = $region33
    $region32: #{gnn_predictor_forward.1} parent=1 // pred_region
      _
    $region33: #{gnn_predictor_forward.1} parent=1 // pred_fallthru
      _
    // Predicated region
    $region34: #{gnn_predictor_forward.1} parent=1 // pred_check
      _
    $region35: #{gnn_predictor_forward.1} parent=1 // pred_check_branch
      %41 = sbr.rel (0) target = $region37
    $region36: #{gnn_predictor_forward.1} parent=1 // pred_region
      _
    $region37: #{gnn_predictor_forward.1} parent=1 // pred_fallthru
      _
    // Predicated region
    $region38: #{gnn_predictor_forward.1} parent=1 // pred_check
      _
    $region39: #{gnn_predictor_forward.1} parent=1 // pred_check_branch
      %43 = sbr.rel (0) target = $region41
    $region40: #{gnn_predictor_forward.1} parent=1 // pred_region
      _
    $region41: #{gnn_predictor_forward.1} parent=1 // pred_fallthru
      _
    // Predicated region
    $region42: #{gnn_predictor_forward.1} parent=1 // pred_check
      _
    $region43: #{gnn_predictor_forward.1} parent=1 // pred_check_branch
      %45 = sbr.rel (0) target = $region45
    $region44: #{gnn_predictor_forward.1} parent=1 // pred_region
      _
    $region45: #{gnn_predictor_forward.1} parent=1 // pred_fallthru
      _
    // Predicated region
    $region46: #{gnn_predictor_forward.1} parent=1 // pred_check
      _
    $region47: #{gnn_predictor_forward.1} parent=1 // pred_check_branch
      %47 = sbr.rel (0) target = $region49
    $region48: #{gnn_predictor_forward.1} parent=1 // pred_region
      _
    $region49: #{gnn_predictor_forward.1} parent=1 // pred_fallthru
      _
    // Predicated region
    $region50: #{gnn_predictor_forward.1} parent=1 // pred_check
      _
    $region51: #{gnn_predictor_forward.1} parent=1 // pred_check_branch
      %49 = sbr.rel (0) target = $region53
    $region52: #{gnn_predictor_forward.1} parent=1 // pred_region
      _
    $region53: #{gnn_predictor_forward.1} parent=1 // pred_fallthru
      _
    // Predicated region
    $region54: #{gnn_predictor_forward.1} parent=1 // pred_check
      _
    $region55: #{gnn_predictor_forward.1} parent=1 // pred_check_branch
      %51 = sbr.rel (0) target = $region57
    $region56: #{gnn_predictor_forward.1} parent=1 // pred_region
      _
    $region57: #{gnn_predictor_forward.1} parent=1 // pred_fallthru
      _
    // Predicated region
    $region58: #{gnn_predictor_forward.1} parent=1 // pred_check
      _
    $region59: #{gnn_predictor_forward.1} parent=1 // pred_check_branch
      %53 = sbr.rel (0) target = $region61
    $region60: #{gnn_predictor_forward.1} parent=1 // pred_region
      _
    $region61: #{gnn_predictor_forward.1} parent=1 // pred_fallthru
      _
    // Predicated region
    $region62: #{gnn_predictor_forward.1} parent=1 // pred_check
      _
    $region63: #{gnn_predictor_forward.1} parent=1 // pred_check_branch
      %55 = sbr.rel (0) target = $region65
    $region64: #{gnn_predictor_forward.1} parent=1 // pred_region
      _
    $region65: #{gnn_predictor_forward.1} parent=1 // pred_fallthru
      _
    // Predicated region
    $region66: #{gnn_predictor_forward.1} parent=1 // pred_check
      _
    $region67: #{gnn_predictor_forward.1} parent=1 // pred_check_branch
      %57 = sbr.rel (0) target = $region69
    $region68: #{gnn_predictor_forward.1} parent=1 // pred_region
      _
    $region69: #{gnn_predictor_forward.1} parent=1 // pred_fallthru
      _
    // Predicated region
    $region70: #{gnn_predictor_forward.1} parent=1 // pred_check
      _
    $region71: #{gnn_predictor_forward.1} parent=1 // pred_check_branch
      %59 = sbr.rel (0) target = $region73
    $region72: #{gnn_predictor_forward.1} parent=1 // pred_region
      _
    $region73: #{gnn_predictor_forward.1} parent=1 // pred_fallthru
      _
    %v61 = vld [vmem:[%s10] sm:$0xff]
    %v62 = vld [vmem:[%s12] sm:$0xff]
    %v63 = vld [vmem:[%s12 + $0x8] sm:$0xff]
    %v64 = vld [vmem:[%s11] sm:$0x3]
    %v65 = vld [vmem:[%s0] sm:$0xff]
    %v66 = vld [vmem:[%s0 + $0x8] sm:$0xff]
    %v67 = vld [vmem:[%s0 + $0x10] sm:$0xff]
    %v68 = vld [vmem:[%s0 + $0x18] sm:$0xff]
    %v69 = vld [vmem:[%s1] sm:$0xff]
    %v70 = vld [vmem:[%s1 + $0x8] sm:$0xff]
    %v71 = vld [vmem:[%s1 + $0x10] sm:$0xff]
    %v72 = vld [vmem:[%s1 + $0x18] sm:$0xff]
    %74 = vset.pattern.permute.xlu0 0
    %75 = vperm.xlu0 %74, %v65
    %v76 = vpop.permute.xlu0 %75
    %79 = vset.pattern.permute.xlu0 0
    %80 = vperm.xlu0 %79, %v66
    %v81 = vpop.permute.xlu0 %80
    %84 = vset.pattern.permute.xlu0 0
    %85 = vperm.xlu0 %84, %v67
    %v86 = vpop.permute.xlu0 %85
    %89 = vset.pattern.permute.xlu0 0
    %90 = vperm.xlu0 %89, %v68
    %v91 = vpop.permute.xlu0 %90
    %v93 = vmul.f32 %v76, %v69
    %v94 = vmul.f32 %v81, %v70
    %v95 = vmul.f32 %v86, %v71
    %v96 = vmul.f32 %v91, %v72
    %v97 = vpack.c.bf16 %v94, %v93
    %v98 = vpack.c.bf16 %v96, %v95
    %v99 = vld [vmem:[%s2] sm:$0xf]
    %v100 = vld [vmem:[%s2 + $0x4] sm:$0xf]
    %v101 = vperm.slane %v61, 0
    %v104 = vunpack.c.l.b16 %v99
    %v105 = vunpack.c.l.b16 %v100
    %v106 = vpack.c.b16 %v105, %v104
    %vm108 = vcmask 130048
    %v110 = vsel %vm108, %v97, 0
    %v113 = vsel %vm108, %v98, 0
    %115 = vmatpush.bf16.msra.mxu0 0
    %116 = vmatpush.bf16.msra.mxu0 0
    %117 = vmatpush.bf16.msra.mxu0 0
    %118 = vmatpush.bf16.msra.mxu0 0
    %119 = vmatpush.bf16.msra.mxu0 0
    %120 = vmatpush.bf16.msra.mxu0 0
    %121 = vmatpush.bf16.msra.mxu0 0
    %122 = vmatpush.bf16.msra.mxu0 %v106
    %123 = vmatmul.bf16.gmra.mxu0 %v110
    %v124 = vpop.f32.mrf.mxu0
    %v125 = vadd.f32 %v101, %v124
    %v126 = vpop.f32.mrf.mxu0
    %v127 = vadd.f32 %v101, %v126
    %128 = vmatmul.bf16.gmra.mxu0 %v113
    %v129 = vpop.f32.mrf.mxu0
    %v130 = vadd.f32 %v101, %v129
    %v131 = vpop.f32.mrf.mxu0
    %v132 = vadd.f32 %v101, %v131
    %133 = vdwg.mxu0
    %vm134 = vcmp.gt.f32.partialorder %v125, 0.0
    %vm135 = vcmp.gt.f32.partialorder %v127, 0.0
    %vm136 = vcmp.gt.f32.partialorder %v130, 0.0
    %vm137 = vcmp.gt.f32.partialorder %v132, 0.0
    %v138 = vmul.f32 %v125, 0.2
    %v139 = vmul.f32 %v127, 0.2
    %v140 = vmul.f32 %v130, 0.2
    %v141 = vmul.f32 %v132, 0.2
    %v142 = vsel %vm134, %v125, %v138
    %v143 = vsel %vm135, %v127, %v139
    %v144 = vsel %vm136, %v130, %v140
    %v145 = vsel %vm137, %v132, %v141
    %v146 = vpack.c.bf16 %v143, %v142
    %v147 = vpack.c.bf16 %v145, %v144
    %v148 = vld [vmem:[%s3] sm:$0xf]
    %v149 = vld [vmem:[%s3 + $0x4] sm:$0xf]
    %v150 = vperm.slane %v61, 1
    %v153 = vunpack.c.l.b16 %v148
    %v154 = vunpack.c.l.b16 %v149
    %v155 = vpack.c.b16 %v154, %v153
    %v158 = vsel %vm108, %v146, 0
    %v161 = vsel %vm108, %v147, 0
    %163 = vmatpush.bf16.msra.mxu0 0
    %164 = vmatpush.bf16.msra.mxu0 0
    %165 = vmatpush.bf16.msra.mxu0 0
    %166 = vmatpush.bf16.msra.mxu0 0
    %167 = vmatpush.bf16.msra.mxu0 0
    %168 = vmatpush.bf16.msra.mxu0 0
    %169 = vmatpush.bf16.msra.mxu0 0
    %170 = vmatpush.bf16.msra.mxu0 %v155
    %171 = vmatmul.bf16.gmra.mxu0 %v158
    %v172 = vpop.f32.mrf.mxu0
    %v173 = vadd.f32 %v150, %v172
    %v174 = vpop.f32.mrf.mxu0
    %v175 = vadd.f32 %v150, %v174
    %176 = vmatmul.bf16.gmra.mxu0 %v161
    %v177 = vpop.f32.mrf.mxu0
    %v178 = vadd.f32 %v150, %v177
    %v179 = vpop.f32.mrf.mxu0
    %v180 = vadd.f32 %v150, %v179
    %181 = vdwg.mxu0
    %vm182 = vcmask 261120
    %v184 = vsel %vm182, 1.0, 0
    %186 = vmatpush.msra.mxu0 0.0
    %187 = vmatpush.msra.mxu0 0.0
    %188 = vmatpush.msra.mxu0 0.0
    %189 = vmatpush.msra.mxu0 0.0
    %190 = vmatpush.msra.mxu0 0.0
    %191 = vmatpush.msra.mxu0 0.0
    %192 = vmatpush.msra.mxu0 0.0
    %193 = vmatpush.msra.mxu0 0.0
    %194 = vmatpush.msra.mxu0 0.0
    %195 = vmatpush.msra.mxu0 0.0
    %196 = vmatpush.msra.mxu0 0.0
    %197 = vmatpush.msra.mxu0 0.0
    %198 = vmatpush.msra.mxu0 %v180
    %199 = vmatpush.msra.mxu0 %v178
    %200 = vmatpush.msra.mxu0 %v175
    %201 = vmatpush.msra.mxu0 %v173
    %202 = vmatmul.f32.gmra.mxu0 %v184
    %v203 = vpop.f32.mrf.mxu0
    %v204 = vadd.f32 0.0, %v203
    %205 = vdwg.mxu0
    %v206 = vmul.f32 %v204, 0.03125
    %v207 = vperm.slane %v206, 0
    %v208 = vsub.f32 %v173, %v207
    %v209 = vsub.f32 %v175, %v207
    %v210 = vsub.f32 %v178, %v207
    %v211 = vsub.f32 %v180, %v207
    %v212 = vmul.f32 %v208, %v208
    %v213 = vmul.f32 %v209, %v209
    %v214 = vmul.f32 %v210, %v210
    %v215 = vmul.f32 %v211, %v211
    %216 = vmatpush.msra.mxu0 0.0
    %217 = vmatpush.msra.mxu0 0.0
    %218 = vmatpush.msra.mxu0 0.0
    %219 = vmatpush.msra.mxu0 0.0
    %220 = vmatpush.msra.mxu0 0.0
    %221 = vmatpush.msra.mxu0 0.0
    %222 = vmatpush.msra.mxu0 0.0
    %223 = vmatpush.msra.mxu0 0.0
    %224 = vmatpush.msra.mxu0 0.0
    %225 = vmatpush.msra.mxu0 0.0
    %226 = vmatpush.msra.mxu0 0.0
    %227 = vmatpush.msra.mxu0 0.0
    %228 = vmatpush.msra.mxu0 %v215
    %229 = vmatpush.msra.mxu0 %v214
    %230 = vmatpush.msra.mxu0 %v213
    %231 = vmatpush.msra.mxu0 %v212
    %232 = vmatmul.f32.gmra.mxu0 %v184
    %v233 = vpop.f32.mrf.mxu0
    %v234 = vadd.f32 0.0, %v233
    %235 = vdwg.mxu0
    %v236 = vmul.f32 %v234, 0.03125
    %v237 = vadd.f32 %v236, 1e-05
    %v238 = vrsqrt.pop %v237
    %v239 = vmul.f32 %v238, %v237
    %v240 = vmul.f32 %v239, %v238
    %v241 = vmul.f32 0.5, %v240
    %v242 = vsub.f32 1.5, %v241
    %v243 = vmul.f32 %v238, %v242
    %vm244 = vweird.f32 %v237
    %vm245 = vweird.f32 %v238
    %vm246 = vmor %vm244, %vm245
    %v247 = vsel %vm246, %v238, %v243
    %v248 = vperm.slane %v247, 0
    %v249 = vmul.f32 %v208, %v248
    %v250 = vmul.f32 %v209, %v248
    %v251 = vmul.f32 %v210, %v248
    %v252 = vmul.f32 %v211, %v248
    %v253 = vperm.slane %v61, 2
    %v254 = vmul.f32 %v249, %v253
    %v255 = vmul.f32 %v250, %v253
    %v256 = vmul.f32 %v251, %v253
    %v257 = vmul.f32 %v252, %v253
    %v258 = vperm.slane %v61, 3
    %v259 = vadd.f32 %v254, %v258
    %v260 = vadd.f32 %v255, %v258
    %v261 = vadd.f32 %v256, %v258
    %v262 = vadd.f32 %v257, %v258
    %v263 = vmul.f32 %v76, %v259
    %v264 = vmul.f32 %v81, %v260
    %v265 = vmul.f32 %v86, %v261
    %v266 = vmul.f32 %v91, %v262
    %v267 = vpack.c.bf16 %v264, %v263
    %v268 = vpack.c.bf16 %v266, %v265
    %v269 = vld [vmem:[%s4] sm:$0xf]
    %v270 = vld [vmem:[%s4 + $0x4] sm:$0xf]
    %v271 = vperm.slane %v61, 4
    %v274 = vunpack.c.l.b16 %v269
    %v275 = vunpack.c.l.b16 %v270
    %v276 = vpack.c.b16 %v275, %v274
    %v279 = vsel %vm108, %v267, 0
    %v282 = vsel %vm108, %v268, 0
    %284 = vmatpush.bf16.msra.mxu0 0
    %285 = vmatpush.bf16.msra.mxu0 0
    %286 = vmatpush.bf16.msra.mxu0 0
    %287 = vmatpush.bf16.msra.mxu0 0
    %288 = vmatpush.bf16.msra.mxu0 0
    %289 = vmatpush.bf16.msra.mxu0 0
    %290 = vmatpush.bf16.msra.mxu0 0
    %291 = vmatpush.bf16.msra.mxu0 %v276
    %292 = vmatmul.bf16.gmra.mxu0 %v279
    %v293 = vpop.f32.mrf.mxu0
    %v294 = vadd.f32 %v271, %v293
    %v295 = vpop.f32.mrf.mxu0
    %v296 = vadd.f32 %v271, %v295
    %297 = vmatmul.bf16.gmra.mxu0 %v282
    %v298 = vpop.f32.mrf.mxu0
    %v299 = vadd.f32 %v271, %v298
    %v300 = vpop.f32.mrf.mxu0
    %v301 = vadd.f32 %v271, %v300
    %302 = vdwg.mxu0
    %vm303 = vcmp.gt.f32.partialorder %v294, 0.0
    %vm304 = vcmp.gt.f32.partialorder %v296, 0.0
    %vm305 = vcmp.gt.f32.partialorder %v299, 0.0
    %vm306 = vcmp.gt.f32.partialorder %v301, 0.0
    %v307 = vmul.f32 %v294, 0.2
    %v308 = vmul.f32 %v296, 0.2
    %v309 = vmul.f32 %v299, 0.2
    %v310 = vmul.f32 %v301, 0.2
    %v311 = vsel %vm303, %v294, %v307
    %v312 = vsel %vm304, %v296, %v308
    %v313 = vsel %vm305, %v299, %v309
    %v314 = vsel %vm306, %v301, %v310
    %315 = vmatpush.msra.mxu0 0.0
    %316 = vmatpush.msra.mxu0 0.0
    %317 = vmatpush.msra.mxu0 0.0
    %318 = vmatpush.msra.mxu0 0.0
    %319 = vmatpush.msra.mxu0 0.0
    %320 = vmatpush.msra.mxu0 0.0
    %321 = vmatpush.msra.mxu0 0.0
    %322 = vmatpush.msra.mxu0 0.0
    %323 = vmatpush.msra.mxu0 0.0
    %324 = vmatpush.msra.mxu0 0.0
    %325 = vmatpush.msra.mxu0 0.0
    %326 = vmatpush.msra.mxu0 0.0
    %327 = vmatpush.msra.mxu0 %v314
    %328 = vmatpush.msra.mxu0 %v313
    %329 = vmatpush.msra.mxu0 %v312
    %330 = vmatpush.msra.mxu0 %v311
    %331 = vmatmul.f32.gmra.mxu0 %v184
    %v332 = vpop.f32.mrf.mxu0
    %v333 = vadd.f32 0.0, %v332
    %334 = vdwg.mxu0
    %v335 = vmul.f32 %v333, 0.03125
    %v336 = vperm.slane %v335, 0
    %v337 = vsub.f32 %v311, %v336
    %v338 = vsub.f32 %v312, %v336
    %v339 = vsub.f32 %v313, %v336
    %v340 = vsub.f32 %v314, %v336
    %v341 = vmul.f32 %v337, %v337
    %v342 = vmul.f32 %v338, %v338
    %v343 = vmul.f32 %v339, %v339
    %v344 = vmul.f32 %v340, %v340
    %345 = vmatpush.msra.mxu0 0.0
    %346 = vmatpush.msra.mxu0 0.0
    %347 = vmatpush.msra.mxu0 0.0
    %348 = vmatpush.msra.mxu0 0.0
    %349 = vmatpush.msra.mxu0 0.0
    %350 = vmatpush.msra.mxu0 0.0
    %351 = vmatpush.msra.mxu0 0.0
    %352 = vmatpush.msra.mxu0 0.0
    %353 = vmatpush.msra.mxu0 0.0
    %354 = vmatpush.msra.mxu0 0.0
    %355 = vmatpush.msra.mxu0 0.0
    %356 = vmatpush.msra.mxu0 0.0
    %357 = vmatpush.msra.mxu0 %v344
    %358 = vmatpush.msra.mxu0 %v343
    %359 = vmatpush.msra.mxu0 %v342
    %360 = vmatpush.msra.mxu0 %v341
    %361 = vmatmul.f32.gmra.mxu0 %v184
    %v362 = vpop.f32.mrf.mxu0
    %v363 = vadd.f32 0.0, %v362
    %364 = vdwg.mxu0
    %v365 = vmul.f32 %v363, 0.03125
    %v366 = vadd.f32 %v365, 1e-05
    %v367 = vrsqrt.pop %v366
    %v368 = vmul.f32 %v367, %v366
    %v369 = vmul.f32 %v368, %v367
    %v370 = vmul.f32 0.5, %v369
    %v371 = vsub.f32 1.5, %v370
    %v372 = vmul.f32 %v367, %v371
    %vm373 = vweird.f32 %v366
    %vm374 = vweird.f32 %v367
    %vm375 = vmor %vm373, %vm374
    %v376 = vsel %vm375, %v367, %v372
    %v377 = vperm.slane %v376, 0
    %v378 = vmul.f32 %v337, %v377
    %v379 = vmul.f32 %v338, %v377
    %v380 = vmul.f32 %v339, %v377
    %v381 = vmul.f32 %v340, %v377
    %v382 = vperm.slane %v61, 5
    %v383 = vmul.f32 %v378, %v382
    %v384 = vmul.f32 %v379, %v382
    %v385 = vmul.f32 %v380, %v382
    %v386 = vmul.f32 %v381, %v382
    %v387 = vperm.slane %v61, 6
    %v388 = vadd.f32 %v383, %v387
    %v389 = vadd.f32 %v384, %v387
    %v390 = vadd.f32 %v385, %v387
    %v391 = vadd.f32 %v386, %v387
    %v392 = vmul.f32 %v76, %v388
    %v393 = vmul.f32 %v81, %v389
    %v394 = vmul.f32 %v86, %v390
    %v395 = vmul.f32 %v91, %v391
    %v396 = vpack.c.bf16 %v393, %v392
    %v397 = vpack.c.bf16 %v395, %v394
    %v398 = vld [vmem:[%s5] sm:$0xf]
    %v399 = vld [vmem:[%s5 + $0x4] sm:$0xf]
    %v400 = vperm.slane %v62, 1
    %v403 = vunpack.c.l.b16 %v398
    %v404 = vunpack.c.l.b16 %v399
    %v405 = vpack.c.b16 %v404, %v403
    %v408 = vsel %vm108, %v396, 0
    %v411 = vsel %vm108, %v397, 0
    %413 = vmatpush.bf16.msra.mxu0 0
    %414 = vmatpush.bf16.msra.mxu0 0
    %415 = vmatpush.bf16.msra.mxu0 0
    %416 = vmatpush.bf16.msra.mxu0 0
    %417 = vmatpush.bf16.msra.mxu0 0
    %418 = vmatpush.bf16.msra.mxu0 0
    %419 = vmatpush.bf16.msra.mxu0 0
    %420 = vmatpush.bf16.msra.mxu0 %v405
    %421 = vmatmul.bf16.gmra.mxu0 %v408
    %v422 = vpop.f32.mrf.mxu0
    %v423 = vadd.f32 %v400, %v422
    %v424 = vpop.f32.mrf.mxu0
    %v425 = vadd.f32 %v400, %v424
    %426 = vmatmul.bf16.gmra.mxu0 %v411
    %v427 = vpop.f32.mrf.mxu0
    %v428 = vadd.f32 %v400, %v427
    %v429 = vpop.f32.mrf.mxu0
    %v430 = vadd.f32 %v400, %v429
    %431 = vdwg.mxu0
    %vm432 = vcmp.gt.f32.partialorder %v423, 0.0
    %vm433 = vcmp.gt.f32.partialorder %v425, 0.0
    %vm434 = vcmp.gt.f32.partialorder %v428, 0.0
    %vm435 = vcmp.gt.f32.partialorder %v430, 0.0
    %v436 = vmul.f32 %v423, 0.2
    %v437 = vmul.f32 %v425, 0.2
    %v438 = vmul.f32 %v428, 0.2
    %v439 = vmul.f32 %v430, 0.2
    %v440 = vsel %vm432, %v423, %v436
    %v441 = vsel %vm433, %v425, %v437
    %v442 = vsel %vm434, %v428, %v438
    %v443 = vsel %vm435, %v430, %v439
    %v444 = vpack.c.bf16 %v441, %v440
    %v445 = vpack.c.bf16 %v443, %v442
    %v446 = vld [vmem:[%s6] sm:$0xf]
    %v447 = vld [vmem:[%s6 + $0x4] sm:$0xf]
    %v448 = vld [vmem:[%s6 + $0x8] sm:$0xf]
    %v449 = vld [vmem:[%s6 + $0xc] sm:$0xf]
    %v450 = vld [vmem:[%s6 + $0x10] sm:$0xf]
    %v451 = vld [vmem:[%s6 + $0x14] sm:$0xf]
    %v452 = vld [vmem:[%s6 + $0x18] sm:$0xf]
    %v453 = vld [vmem:[%s6 + $0x1c] sm:$0xf]
    %v454 = vperm.slane %v62, 2
    %v463 = vunpack.c.l.b16 %v446
    %v464 = vunpack.c.l.b16 %v447
    %v465 = vunpack.c.l.b16 %v448
    %v466 = vunpack.c.l.b16 %v449
    %v467 = vunpack.c.l.b16 %v450
    %v468 = vunpack.c.l.b16 %v451
    %v469 = vunpack.c.l.b16 %v452
    %v470 = vunpack.c.l.b16 %v453
    %v471 = vpack.c.b16 %v464, %v463
    %v472 = vpack.c.b16 %v466, %v465
    %v473 = vpack.c.b16 %v468, %v467
    %v474 = vpack.c.b16 %v470, %v469
    %vm479 = vcmask 523264
    %v481 = vsel %vm479, %v444, 0
    %v484 = vsel %vm479, %v445, 0
    %486 = vmatpush.bf16.msra.mxu0 0
    %487 = vmatpush.bf16.msra.mxu0 0
    %488 = vmatpush.bf16.msra.mxu0 0
    %489 = vmatpush.bf16.msra.mxu0 0
    %490 = vmatpush.bf16.msra.mxu0 %v474
    %491 = vmatpush.bf16.msra.mxu0 %v473
    %492 = vmatpush.bf16.msra.mxu0 %v472
    %493 = vmatpush.bf16.msra.mxu0 %v471
    %494 = vmatmul.bf16.gmra.mxu0 %v481
    %v495 = vpop.f32.mrf.mxu0
    %v496 = vadd.f32 %v454, %v495
    %v497 = vpop.f32.mrf.mxu0
    %v498 = vadd.f32 %v454, %v497
    %499 = vmatmul.bf16.gmra.mxu0 %v484
    %v500 = vpop.f32.mrf.mxu0
    %v501 = vadd.f32 %v454, %v500
    %v502 = vpop.f32.mrf.mxu0
    %v503 = vadd.f32 %v454, %v502
    %504 = vdwg.mxu0
    %vm505 = vcmp.gt.f32.partialorder %v496, 0.0
    %vm506 = vcmp.gt.f32.partialorder %v498, 0.0
    %vm507 = vcmp.gt.f32.partialorder %v501, 0.0
    %vm508 = vcmp.gt.f32.partialorder %v503, 0.0
    %v509 = vmul.f32 %v496, 0.2
    %v510 = vmul.f32 %v498, 0.2
    %v511 = vmul.f32 %v501, 0.2
    %v512 = vmul.f32 %v503, 0.2
    %v513 = vsel %vm505, %v496, %v509
    %v514 = vsel %vm506, %v498, %v510
    %v515 = vsel %vm507, %v501, %v511
    %v516 = vsel %vm508, %v503, %v512
    %v517 = vld [vmem:[%s13] sm:$0xff]
    %vm518 = vcmask 64512
    %v520 = vsel %vm518, %v513, 0
    %v523 = vsel %vm518, %v514, 0
    %v526 = vsel %vm518, %v515, 0
    %v529 = vsel %vm518, %v516, 0
    %531 = vmatpush.msra.mxu0 0.0
    %532 = vmatpush.msra.mxu0 0.0
    %533 = vmatpush.msra.mxu0 0.0
    %534 = vmatpush.msra.mxu0 0.0
    %535 = vmatpush.msra.mxu0 0.0
    %536 = vmatpush.msra.mxu0 0.0
    %537 = vmatpush.msra.mxu0 0.0
    %538 = vmatpush.msra.mxu0 0.0
    %539 = vmatpush.msra.mxu0 0.0
    %540 = vmatpush.msra.mxu0 0.0
    %541 = vmatpush.msra.mxu0 0.0
    %542 = vmatpush.msra.mxu0 0.0
    %543 = vmatpush.msra.mxu0 0.0
    %544 = vmatpush.msra.mxu0 0.0
    %545 = vmatpush.msra.mxu0 0.0
    %546 = vmatpush.msra.mxu0 %v517
    %547 = vmatmul.f32.gmra.mxu0 %v520
    %v548 = vpop.f32.mrf.mxu0
    %v549 = vadd.f32 0.0, %v548
    %550 = vmatmul.f32.gmra.mxu0 %v523
    %v551 = vpop.f32.mrf.mxu0
    %v552 = vadd.f32 0.0, %v551
    %553 = vmatmul.f32.gmra.mxu0 %v526
    %v554 = vpop.f32.mrf.mxu0
    %v555 = vadd.f32 0.0, %v554
    %556 = vmatmul.f32.gmra.mxu0 %v529
    %v557 = vpop.f32.mrf.mxu0
    %v558 = vadd.f32 0.0, %v557
    %559 = vdwg.mxu0
    %v560 = vld [vmem:[%s14] sm:$0xff]
    %v561 = vld [vmem:[%s14 + $0x8] sm:$0xff]
    %v562 = vld [vmem:[%s14 + $0x10] sm:$0xff]
    %v563 = vld [vmem:[%s14 + $0x18] sm:$0xff]
    %v564 = vmul.f32 %v549, %v560
    %v565 = vmul.f32 %v552, %v561
    %v566 = vmul.f32 %v555, %v562
    %v567 = vmul.f32 %v558, %v563
    %v568 = vld [vmem:[%s15] sm:$0x3]
    %v570 = vsel %vm182, %v568, 0
    %572 = vmatpush.msra.mxu0 0.0
    %573 = vmatpush.msra.mxu0 0.0
    %574 = vmatpush.msra.mxu0 0.0
    %575 = vmatpush.msra.mxu0 0.0
    %576 = vmatpush.msra.mxu0 0.0
    %577 = vmatpush.msra.mxu0 0.0
    %578 = vmatpush.msra.mxu0 0.0
    %579 = vmatpush.msra.mxu0 0.0
    %580 = vmatpush.msra.mxu0 0.0
    %581 = vmatpush.msra.mxu0 0.0
    %582 = vmatpush.msra.mxu0 0.0
    %583 = vmatpush.msra.mxu0 0.0
    %584 = vmatpush.msra.mxu0 %v567
    %585 = vmatpush.msra.mxu0 %v566
    %586 = vmatpush.msra.mxu0 %v565
    %587 = vmatpush.msra.mxu0 %v564
    %588 = vmatmul.f32.gmra.mxu0 %v570
    %v589 = vpop.f32.mrf.mxu0
    %v590 = vadd.f32 0.0, %v589
    %591 = vdwg.mxu0
    %v592 = vld [vmem:[%s16] sm:$0xff]
    %v593 = vld [vmem:[%s16 + $0x8] sm:$0xff]
    %v594 = vld [vmem:[%s16 + $0x10] sm:$0xff]
    %v595 = vld [vmem:[%s16 + $0x18] sm:$0xff]
    %v596 = vld [vmem:[%s16 + $0x20] sm:$0xff]
    %v597 = vld [vmem:[%s16 + $0x28] sm:$0xff]
    %v598 = vld [vmem:[%s16 + $0x30] sm:$0xff]
    %v599 = vld [vmem:[%s16 + $0x38] sm:$0xff]
    %v600 = vld [vmem:[%s16 + $0x40] sm:$0xff]
    %v601 = vld [vmem:[%s16 + $0x48] sm:$0xff]
    %v602 = vld [vmem:[%s16 + $0x50] sm:$0xff]
    %v603 = vld [vmem:[%s16 + $0x58] sm:$0xff]
    %v604 = vld [vmem:[%s16 + $0x60] sm:$0xff]
    %v605 = vld [vmem:[%s16 + $0x68] sm:$0xff]
    %v606 = vld [vmem:[%s16 + $0x70] sm:$0xff]
    %v607 = vld [vmem:[%s16 + $0x78] sm:$0xff]
    %v608 = vld [vmem:[%s17] sm:$0xff]
    %v609 = vld [vmem:[%s17 + $0x8] sm:$0xff]
    %vm610 = vcmask 15360
    %v611 = vsel %vm610, 1.0, 0
    %vm613 = vcmask 1041408
    %v615 = vsel %vm613, %v590, 0
    %617 = vmatpush.msra.mxu0 0.0
    %618 = vmatpush.msra.mxu0 0.0
    %619 = vmatpush.msra.mxu0 0.0
    %620 = vmatpush.msra.mxu0 0.0
    %621 = vmatpush.msra.mxu0 0.0
    %622 = vmatpush.msra.mxu0 0.0
    %623 = vmatpush.msra.mxu0 0.0
    %624 = vmatpush.msra.mxu0 0.0
    %625 = vmatpush.msra.mxu0 0.0
    %626 = vmatpush.msra.mxu0 0.0
    %627 = vmatpush.msra.mxu0 0.0
    %628 = vmatpush.msra.mxu0 0.0
    %629 = vmatpush.msra.mxu0 0.0
    %630 = vmatpush.msra.mxu0 0.0
    %631 = vmatpush.msra.mxu0 0.0
    %632 = vmatpush.msra.mxu0 %v615
    %633 = vmatmul.f32.gmra.mxu0 %v611
    %v634 = vpop.f32.mrf.mxu0
    %v635 = vadd.f32 0.0, %v634
    %636 = vdwg.mxu0
    %637 = vmatpush.msra.mxu0 %v607
    %638 = vmatpush.msra.mxu0 %v606
    %639 = vmatpush.msra.mxu0 %v605
    %640 = vmatpush.msra.mxu0 %v604
    %641 = vmatpush.msra.mxu0 %v603
    %642 = vmatpush.msra.mxu0 %v602
    %643 = vmatpush.msra.mxu0 %v601
    %644 = vmatpush.msra.mxu0 %v600
    %645 = vmatpush.msra.mxu0 %v599
    %646 = vmatpush.msra.mxu0 %v598
    %647 = vmatpush.msra.mxu0 %v597
    %648 = vmatpush.msra.mxu0 %v596
    %649 = vmatpush.msra.mxu0 %v595
    %650 = vmatpush.msra.mxu0 %v594
    %651 = vmatpush.msra.mxu0 %v593
    %652 = vmatpush.msra.mxu0 %v592
    %653 = vmatmul.f32.gmra.mxu0 %v635
    %v654 = vpop.f32.mrf.mxu0
    %v655 = vadd.f32 0.0, %v654
    %656 = vdwg.mxu0
    %v657 = vmul.f32 %v655, 0.0625
    %v659 = vsel %vm108, %v657, 0
    %661 = vmatpush.msra.mxu0 0.0
    %662 = vmatpush.msra.mxu0 0.0
    %663 = vmatpush.msra.mxu0 0.0
    %664 = vmatpush.msra.mxu0 0.0
    %665 = vmatpush.msra.mxu0 0.0
    %666 = vmatpush.msra.mxu0 0.0
    %667 = vmatpush.msra.mxu0 0.0
    %668 = vmatpush.msra.mxu0 0.0
    %669 = vmatpush.msra.mxu0 0.0
    %670 = vmatpush.msra.mxu0 0.0
    %671 = vmatpush.msra.mxu0 0.0
    %672 = vmatpush.msra.mxu0 0.0
    %673 = vmatpush.msra.mxu0 0.0
    %674 = vmatpush.msra.mxu0 0.0
    %675 = vmatpush.msra.mxu0 %v609
    %676 = vmatpush.msra.mxu0 %v608
    %677 = vmatmul.f32.gmra.mxu0 %v659
    %v678 = vpop.f32.mrf.mxu0
    %v679 = vadd.f32 0.0, %v678
    %680 = vdwg.mxu0
    %v681 = vperm.slane %v679, 0
    %v682 = vsub.f32 %v590, %v681
    %v683 = vmul.f32 %v682, %v682
    %v685 = vsel %vm613, %v683, 0
    %687 = vmatpush.msra.mxu0 0.0
    %688 = vmatpush.msra.mxu0 0.0
    %689 = vmatpush.msra.mxu0 0.0
    %690 = vmatpush.msra.mxu0 0.0
    %691 = vmatpush.msra.mxu0 0.0
    %692 = vmatpush.msra.mxu0 0.0
    %693 = vmatpush.msra.mxu0 0.0
    %694 = vmatpush.msra.mxu0 0.0
    %695 = vmatpush.msra.mxu0 0.0
    %696 = vmatpush.msra.mxu0 0.0
    %697 = vmatpush.msra.mxu0 0.0
    %698 = vmatpush.msra.mxu0 0.0
    %699 = vmatpush.msra.mxu0 0.0
    %700 = vmatpush.msra.mxu0 0.0
    %701 = vmatpush.msra.mxu0 0.0
    %702 = vmatpush.msra.mxu0 %v685
    %703 = vmatmul.f32.gmra.mxu0 %v611
    %v704 = vpop.f32.mrf.mxu0
    %v705 = vadd.f32 0.0, %v704
    %706 = vdwg.mxu0
    %707 = vmatpush.msra.mxu0 %v607
    %708 = vmatpush.msra.mxu0 %v606
    %709 = vmatpush.msra.mxu0 %v605
    %710 = vmatpush.msra.mxu0 %v604
    %711 = vmatpush.msra.mxu0 %v603
    %712 = vmatpush.msra.mxu0 %v602
    %713 = vmatpush.msra.mxu0 %v601
    %714 = vmatpush.msra.mxu0 %v600
    %715 = vmatpush.msra.mxu0 %v599
    %716 = vmatpush.msra.mxu0 %v598
    %717 = vmatpush.msra.mxu0 %v597
    %718 = vmatpush.msra.mxu0 %v596
    %719 = vmatpush.msra.mxu0 %v595
    %720 = vmatpush.msra.mxu0 %v594
    %721 = vmatpush.msra.mxu0 %v593
    %722 = vmatpush.msra.mxu0 %v592
    %723 = vmatmul.f32.gmra.mxu0 %v705
    %v724 = vpop.f32.mrf.mxu0
    %v725 = vadd.f32 0.0, %v724
    %726 = vdwg.mxu0
    %v727 = vmul.f32 %v725, 0.0625
    %v728 = vadd.f32 %v727, 1e-05
    %v729 = vrsqrt.pop %v728
    %v730 = vmul.f32 %v729, %v728
    %v731 = vmul.f32 %v730, %v729
    %v732 = vmul.f32 0.5, %v731
    %v733 = vsub.f32 1.5, %v732
    %v734 = vmul.f32 %v729, %v733
    %vm735 = vweird.f32 %v728
    %vm736 = vweird.f32 %v729
    %vm737 = vmor %vm735, %vm736
    %v738 = vsel %vm737, %v729, %v734
    %v740 = vsel %vm108, %v738, 0
    %742 = vmatpush.msra.mxu0 0.0
    %743 = vmatpush.msra.mxu0 0.0
    %744 = vmatpush.msra.mxu0 0.0
    %745 = vmatpush.msra.mxu0 0.0
    %746 = vmatpush.msra.mxu0 0.0
    %747 = vmatpush.msra.mxu0 0.0
    %748 = vmatpush.msra.mxu0 0.0
    %749 = vmatpush.msra.mxu0 0.0
    %750 = vmatpush.msra.mxu0 0.0
    %751 = vmatpush.msra.mxu0 0.0
    %752 = vmatpush.msra.mxu0 0.0
    %753 = vmatpush.msra.mxu0 0.0
    %754 = vmatpush.msra.mxu0 0.0
    %755 = vmatpush.msra.mxu0 0.0
    %756 = vmatpush.msra.mxu0 %v609
    %757 = vmatpush.msra.mxu0 %v608
    %758 = vmatmul.f32.gmra.mxu0 %v740
    %v759 = vpop.f32.mrf.mxu0
    %v760 = vadd.f32 0.0, %v759
    %761 = vdwg.mxu0
    %v762 = vperm.slane %v760, 0
    %v763 = vmul.f32 %v682, %v762
    %v764 = vperm.slane %v64, 0
    %v765 = vmul.f32 %v763, %v764
    %v766 = vperm.slane %v64, 1
    %v767 = vadd.f32 %v765, %v766
    %v768 = vpack.c.bf16 %v767, %v767
    %v769 = vld [vmem:[%s7] sm:$0xff]
    %v770 = vld [vmem:[%s7 + $0x8] sm:$0xff]
    %v771 = vld [vmem:[%s7 + $0x10] sm:$0xff]
    %v772 = vld [vmem:[%s7 + $0x18] sm:$0xff]
    %v773 = vld [vmem:[%s7 + $0x20] sm:$0xff]
    %v774 = vld [vmem:[%s7 + $0x28] sm:$0xff]
    %v775 = vld [vmem:[%s7 + $0x30] sm:$0xff]
    %v776 = vld [vmem:[%s7 + $0x38] sm:$0xff]
    %v777 = vld [vmem:[%s7 + $0x40] sm:$0xff]
    %v778 = vld [vmem:[%s7 + $0x48] sm:$0xff]
    %v779 = vld [vmem:[%s7 + $0x50] sm:$0xff]
    %v780 = vld [vmem:[%s7 + $0x58] sm:$0xff]
    %v781 = vld [vmem:[%s7 + $0x60] sm:$0xff]
    %v782 = vld [vmem:[%s7 + $0x68] sm:$0xff]
    %v783 = vld [vmem:[%s7 + $0x70] sm:$0xff]
    %v784 = vld [vmem:[%s7 + $0x78] sm:$0xff]
    %v785 = vperm.slane %v62, 0
    %v786 = vperm.slane %v63, 0
    %v803 = vunpack.c.l.b16 %v769
    %v804 = vunpack.c.h.b16 %v769
    %v805 = vunpack.c.l.b16 %v770
    %v806 = vunpack.c.h.b16 %v770
    %v807 = vunpack.c.l.b16 %v771
    %v808 = vunpack.c.h.b16 %v771
    %v809 = vunpack.c.l.b16 %v772
    %v810 = vunpack.c.h.b16 %v772
    %v811 = vunpack.c.l.b16 %v773
    %v812 = vunpack.c.h.b16 %v773
    %v813 = vunpack.c.l.b16 %v774
    %v814 = vunpack.c.h.b16 %v774
    %v815 = vunpack.c.l.b16 %v775
    %v816 = vunpack.c.h.b16 %v775
    %v817 = vunpack.c.l.b16 %v776
    %v818 = vunpack.c.h.b16 %v776
    %v819 = vunpack.c.l.b16 %v777
    %v820 = vunpack.c.h.b16 %v777
    %v821 = vunpack.c.l.b16 %v778
    %v822 = vunpack.c.h.b16 %v778
    %v823 = vunpack.c.l.b16 %v779
    %v824 = vunpack.c.h.b16 %v779
    %v825 = vunpack.c.l.b16 %v780
    %v826 = vunpack.c.h.b16 %v780
    %v827 = vunpack.c.l.b16 %v781
    %v828 = vunpack.c.h.b16 %v781
    %v829 = vunpack.c.l.b16 %v782
    %v830 = vunpack.c.h.b16 %v782
    %v831 = vunpack.c.l.b16 %v783
    %v832 = vunpack.c.h.b16 %v783
    %v833 = vunpack.c.l.b16 %v784
    %v834 = vunpack.c.h.b16 %v784
    %v835 = vpack.c.b16 %v805, %v803
    %v836 = vpack.c.b16 %v806, %v804
    %v837 = vpack.c.b16 %v809, %v807
    %v838 = vpack.c.b16 %v810, %v808
    %v839 = vpack.c.b16 %v813, %v811
    %v840 = vpack.c.b16 %v814, %v812
    %v841 = vpack.c.b16 %v817, %v815
    %v842 = vpack.c.b16 %v818, %v816
    %v843 = vpack.c.b16 %v821, %v819
    %v844 = vpack.c.b16 %v822, %v820
    %v845 = vpack.c.b16 %v825, %v823
    %v846 = vpack.c.b16 %v826, %v824
    %v847 = vpack.c.b16 %v829, %v827
    %v848 = vpack.c.b16 %v830, %v828
    %v849 = vpack.c.b16 %v833, %v831
    %v850 = vpack.c.b16 %v834, %v832
    %867 = vmatpush.bf16.msra.mxu0 %v849
    %868 = vmatpush.bf16.msra.mxu0 %v847
    %869 = vmatpush.bf16.msra.mxu0 %v845
    %870 = vmatpush.bf16.msra.mxu0 %v843
    %871 = vmatpush.bf16.msra.mxu0 %v841
    %872 = vmatpush.bf16.msra.mxu0 %v839
    %873 = vmatpush.bf16.msra.mxu0 %v837
    %874 = vmatpush.bf16.msra.mxu0 %v835
    %875 = vmatmul.bf16.gmra.mxu0 %v768
    %v876 = vpop.f32.mrf.mxu0
    %v877 = vadd.f32 %v785, %v876
    %v878 = vpop.f32.mrf.mxu0
    %879 = vdwg.mxu0
    %880 = vmatpush.bf16.msra.mxu0 %v850
    %881 = vmatpush.bf16.msra.mxu0 %v848
    %882 = vmatpush.bf16.msra.mxu0 %v846
    %883 = vmatpush.bf16.msra.mxu0 %v844
    %884 = vmatpush.bf16.msra.mxu0 %v842
    %885 = vmatpush.bf16.msra.mxu0 %v840
    %886 = vmatpush.bf16.msra.mxu0 %v838
    %887 = vmatpush.bf16.msra.mxu0 %v836
    %888 = vmatmul.bf16.gmra.mxu0 %v768
    %v889 = vpop.f32.mrf.mxu0
    %v890 = vadd.f32 %v786, %v889
    %v891 = vpop.f32.mrf.mxu0
    %892 = vdwg.mxu0
    %vm893 = vcmp.gt.f32.partialorder %v877, 0.0
    %vm894 = vcmp.gt.f32.partialorder %v890, 0.0
    %v895 = vmul.f32 %v877, 0.2
    %v896 = vmul.f32 %v890, 0.2
    %v897 = vsel %vm893, %v877, %v895
    %v898 = vsel %vm894, %v890, %v896
    %v899 = vpack.c.bf16 %v897, %v897
    %v900 = vpack.c.bf16 %v898, %v898
    %v901 = vld [vmem:[%s8] sm:$0xf]
    %v902 = vld [vmem:[%s8 + $0x4] sm:$0xf]
    %v903 = vld [vmem:[%s8 + $0x8] sm:$0xf]
    %v904 = vld [vmem:[%s8 + $0xc] sm:$0xf]
    %v905 = vld [vmem:[%s8 + $0x10] sm:$0xf]
    %v906 = vld [vmem:[%s8 + $0x14] sm:$0xf]
    %v907 = vld [vmem:[%s8 + $0x18] sm:$0xf]
    %v908 = vld [vmem:[%s8 + $0x1c] sm:$0xf]
    %v909 = vld [vmem:[%s8 + $0x20] sm:$0xf]
    %v910 = vld [vmem:[%s8 + $0x24] sm:$0xf]
    %v911 = vld [vmem:[%s8 + $0x28] sm:$0xf]
    %v912 = vld [vmem:[%s8 + $0x2c] sm:$0xf]
    %v913 = vld [vmem:[%s8 + $0x30] sm:$0xf]
    %v914 = vld [vmem:[%s8 + $0x34] sm:$0xf]
    %v915 = vld [vmem:[%s8 + $0x38] sm:$0xf]
    %v916 = vld [vmem:[%s8 + $0x3c] sm:$0xf]
    %v917 = vld [vmem:[%s8 + $0x40] sm:$0xf]
    %v918 = vld [vmem:[%s8 + $0x44] sm:$0xf]
    %v919 = vld [vmem:[%s8 + $0x48] sm:$0xf]
    %v920 = vld [vmem:[%s8 + $0x4c] sm:$0xf]
    %v921 = vld [vmem:[%s8 + $0x50] sm:$0xf]
    %v922 = vld [vmem:[%s8 + $0x54] sm:$0xf]
    %v923 = vld [vmem:[%s8 + $0x58] sm:$0xf]
    %v924 = vld [vmem:[%s8 + $0x5c] sm:$0xf]
    %v925 = vld [vmem:[%s8 + $0x60] sm:$0xf]
    %v926 = vld [vmem:[%s8 + $0x64] sm:$0xf]
    %v927 = vld [vmem:[%s8 + $0x68] sm:$0xf]
    %v928 = vld [vmem:[%s8 + $0x6c] sm:$0xf]
    %v929 = vld [vmem:[%s8 + $0x70] sm:$0xf]
    %v930 = vld [vmem:[%s8 + $0x74] sm:$0xf]
    %v931 = vld [vmem:[%s8 + $0x78] sm:$0xf]
    %v932 = vld [vmem:[%s8 + $0x7c] sm:$0xf]
    %v933 = vperm.slane %v62, 3
    %v966 = vunpack.c.l.b16 %v901
    %v967 = vunpack.c.l.b16 %v902
    %v968 = vunpack.c.l.b16 %v903
    %v969 = vunpack.c.l.b16 %v904
    %v970 = vunpack.c.l.b16 %v905
    %v971 = vunpack.c.l.b16 %v906
    %v972 = vunpack.c.l.b16 %v907
    %v973 = vunpack.c.l.b16 %v908
    %v974 = vunpack.c.l.b16 %v909
    %v975 = vunpack.c.l.b16 %v910
    %v976 = vunpack.c.l.b16 %v911
    %v977 = vunpack.c.l.b16 %v912
    %v978 = vunpack.c.l.b16 %v913
    %v979 = vunpack.c.l.b16 %v914
    %v980 = vunpack.c.l.b16 %v915
    %v981 = vunpack.c.l.b16 %v916
    %v982 = vunpack.c.l.b16 %v917
    %v983 = vunpack.c.l.b16 %v918
    %v984 = vunpack.c.l.b16 %v919
    %v985 = vunpack.c.l.b16 %v920
    %v986 = vunpack.c.l.b16 %v921
    %v987 = vunpack.c.l.b16 %v922
    %v988 = vunpack.c.l.b16 %v923
    %v989 = vunpack.c.l.b16 %v924
    %v990 = vunpack.c.l.b16 %v925
    %v991 = vunpack.c.l.b16 %v926
    %v992 = vunpack.c.l.b16 %v927
    %v993 = vunpack.c.l.b16 %v928
    %v994 = vunpack.c.l.b16 %v929
    %v995 = vunpack.c.l.b16 %v930
    %v996 = vunpack.c.l.b16 %v931
    %v997 = vunpack.c.l.b16 %v932
    %v998 = vpack.c.b16 %v967, %v966
    %v999 = vpack.c.b16 %v969, %v968
    %v1000 = vpack.c.b16 %v971, %v970
    %v1001 = vpack.c.b16 %v973, %v972
    %v1002 = vpack.c.b16 %v975, %v974
    %v1003 = vpack.c.b16 %v977, %v976
    %v1004 = vpack.c.b16 %v979, %v978
    %v1005 = vpack.c.b16 %v981, %v980
    %v1006 = vpack.c.b16 %v983, %v982
    %v1007 = vpack.c.b16 %v985, %v984
    %v1008 = vpack.c.b16 %v987, %v986
    %v1009 = vpack.c.b16 %v989, %v988
    %v1010 = vpack.c.b16 %v991, %v990
    %v1011 = vpack.c.b16 %v993, %v992
    %v1012 = vpack.c.b16 %v995, %v994
    %v1013 = vpack.c.b16 %v997, %v996
    %1030 = vmatpush.bf16.msra.mxu0 %v1005
    %1031 = vmatpush.bf16.msra.mxu0 %v1004
    %1032 = vmatpush.bf16.msra.mxu0 %v1003
    %1033 = vmatpush.bf16.msra.mxu0 %v1002
    %1034 = vmatpush.bf16.msra.mxu0 %v1001
    %1035 = vmatpush.bf16.msra.mxu0 %v1000
    %1036 = vmatpush.bf16.msra.mxu0 %v999
    %1037 = vmatpush.bf16.msra.mxu0 %v998
    %1038 = vmatmul.bf16.gmra.mxu0 %v899
    %v1039 = vpop.f32.mrf.mxu0
    %v1040 = vadd.f32 %v933, %v1039
    %v1041 = vpop.f32.mrf.mxu0
    %1042 = vdwg.mxu0
    %1043 = vmatpush.bf16.msra.mxu0 %v1013
    %1044 = vmatpush.bf16.msra.mxu0 %v1012
    %1045 = vmatpush.bf16.msra.mxu0 %v1011
    %1046 = vmatpush.bf16.msra.mxu0 %v1010
    %1047 = vmatpush.bf16.msra.mxu0 %v1009
    %1048 = vmatpush.bf16.msra.mxu0 %v1008
    %1049 = vmatpush.bf16.msra.mxu0 %v1007
    %1050 = vmatpush.bf16.msra.mxu0 %v1006
    %1051 = vmatmul.bf16.gmra.mxu0 %v900
    %v1052 = vpop.f32.mrf.mxu0
    %v1053 = vadd.f32 %v1040, %v1052
    %v1054 = vpop.f32.mrf.mxu0
    %1055 = vdwg.mxu0
    %vm1056 = vcmp.gt.f32.partialorder %v1053, 0.0
    %v1057 = vmul.f32 %v1053, 0.2
    %v1058 = vsel %vm1056, %v1053, %v1057
    %v1059 = vpack.c.bf16 %v1058, %v1058
    %v1060 = vld [vmem:[%s9] sm:$0xf]
    %v1061 = vld [vmem:[%s9 + $0x4] sm:$0xf]
    %v1062 = vld [vmem:[%s9 + $0x8] sm:$0xf]
    %v1063 = vld [vmem:[%s9 + $0xc] sm:$0xf]
    %v1064 = vperm.slane %v62, 4
    %v1069 = vunpack.c.l.b16 %v1060
    %v1070 = vunpack.c.l.b16 %v1061
    %v1071 = vunpack.c.l.b16 %v1062
    %v1072 = vunpack.c.l.b16 %v1063
    %v1073 = vpack.c.b16 %v1070, %v1069
    %v1074 = vpack.c.b16 %v1072, %v1071
    %v1078 = vsel %vm182, %v1059, 0
    %1080 = vmatpush.bf16.msra.mxu0 0
    %1081 = vmatpush.bf16.msra.mxu0 0
    %1082 = vmatpush.bf16.msra.mxu0 0
    %1083 = vmatpush.bf16.msra.mxu0 0
    %1084 = vmatpush.bf16.msra.mxu0 0
    %1085 = vmatpush.bf16.msra.mxu0 0
    %1086 = vmatpush.bf16.msra.mxu0 %v1074
    %1087 = vmatpush.bf16.msra.mxu0 %v1073
    %1088 = vmatmul.bf16.gmra.mxu0 %v1078
    %v1089 = vpop.f32.mrf.mxu0
    %v1090 = vadd.f32 %v1064, %v1089
    %v1091 = vpop.f32.mrf.mxu0
    %1092 = vdwg.mxu0
    %vm1093 = vcmask 9216
    %1094 = vst.msk [vmem:[#allocation2] sm:$0x3] %vm1093, %v1090
    // Predicated region
    $region74: #{gnn_predictor_forward.1} parent=1 // pred_check
      _
    $region75: #{gnn_predictor_forward.1} parent=1 // pred_check_branch
      %1096 = sbr.rel (0) target = $region77
    $region76: #{gnn_predictor_forward.1} parent=1 // pred_region
      %1098 = vsyncadd [#allocation3], 0
      %s1100 = sshll.u32 [#allocation2], 4
      %s1101 = int_to_ptr.vmem [resolvable:$true] %s1100
      %s1102 = sshll.u32 %s18, 4
      %s1103 = int_to_ptr.hbm [resolvable:$true] %s1102
      %1105 = dma.vmem_to_hbm [thread:$0]  %s1101, 32, %s1103, [#allocation3]
    $region77: #{gnn_predictor_forward.1} parent=1 // pred_fallthru
      _
    // Predicated region
    $region78: #{gnn_predictor_forward.1} parent=1 // pred_check
      _
    $region79: #{gnn_predictor_forward.1} parent=1 // pred_check_branch
      %1107 = sbr.rel (0) target = $region81
    $region80: #{gnn_predictor_forward.1} parent=1 // pred_region
      %1109 = dma.done [#allocation3], 32
    $region81: #{gnn_predictor_forward.1} parent=1 // pred_fallthru
      _
    %1110 = vsyncpa [#allocation3], 1

</llo_original>
